<compile_context>
chip_gen: v5e
topology: v5e:2x2
jax: 0.10.0
libtpu: 0.0.40
codegen_flags: <defaults>
</compile_context>

<pallas_src>
import functools

import jax
import jax.numpy as jnp
from jax.experimental import pallas as pl
from jax.experimental.pallas import tpu as pltpu

LANE = 128
SUBLANE = 8


def _round_up(n, m):
    return ((n + m - 1) // m) * m


def _auto_batch_tile(batch):
    """Pick a batch tile: tiny batches -> multiple of 8 (latency regime, no padding waste);
    large batches -> 256/512 tile with >=2 grid steps (fills MXU M, amortizes per-step
    overhead, and lets the parallel batch axis shard across v7x's 2 TensorCores)."""
    bp8 = _round_up(max(batch, SUBLANE), SUBLANE)
    if bp8 <= 256:
        return bp8
    tile = 512
    while tile > 256 and _round_up(batch, tile) // tile < 2:
        tile //= 2
    return tile


def dense_model_kernel(x_ref,
                       w1_ref, c1_ref,
                       w2_ref, c2_ref,
                       w3_ref, c3_ref,
                       w4_ref, b4_ref,
                       o_ref):
    """Whole forward pass for one batch tile: 4 MXU matmuls + fused shift/ReLU."""
    # fc1 (+ folded bn1) -> relu     (x is already bf16; dropout == identity in eval mode)
    h = jnp.dot(x_ref[...], w1_ref[...], preferred_element_type=jnp.float32)
    h = jnp.maximum(h + c1_ref[...], 0.0)
    # fc2 (+ folded bn2) -> relu
    h = jnp.dot(h.astype(w2_ref.dtype), w2_ref[...], preferred_element_type=jnp.float32)
    h = jnp.maximum(h + c2_ref[...], 0.0)
    # fc3 (+ folded bn3) -> relu   (lane-padded to 128; padded shift lanes are 0)
    h = jnp.dot(h.astype(w3_ref.dtype), w3_ref[...], preferred_element_type=jnp.float32)
    h = jnp.maximum(h + c3_ref[...], 0.0)
    # fc4 (lane-padded output; wrapper slices back to num_classes)
    out = jnp.dot(h.astype(w4_ref.dtype), w4_ref[...], preferred_element_type=jnp.float32)
    o_ref[...] = (out + b4_ref[...]).astype(o_ref.dtype)


@functools.partial(jax.jit,
                   static_argnames=("num_classes", "batch_tile", "out_dtype"))
def dense_model_forward(x, params, *, num_classes, batch_tile=None,
                        out_dtype=jnp.float32):
    B, D = x.shape
    if batch_tile is None:
        batch_tile = _auto_batch_tile(B)
    Bp = _round_up(B, batch_tile)
    ncp = params["b4"].shape[-1]  # lane-padded class dim (multiple of 128)

    # Pad the batch to a tile multiple and cast to bf16 once (halves input DMA bytes).
    xp = jnp.pad(x, ((0, Bp - B), (0, 0))).astype(params["w1"].dtype)

    def resident(arr):
        # Whole-array block with a constant index map: stays resident in VMEM across the
        # batch grid (no re-DMA between steps).
        shape = arr.shape
        return pl.BlockSpec(shape, lambda i: (0,) * len(shape))

    out = pl.pallas_call(
        dense_model_kernel,
        out_shape=jax.ShapeDtypeStruct((Bp, ncp), out_dtype),
        grid_spec=pltpu.PrefetchScalarGridSpec(
            num_scalar_prefetch=0,
            grid=(Bp // batch_tile,),
            in_specs=[
                pl.BlockSpec((batch_tile, D), lambda i: (i, 0)),
                resident(params["w1"]), resident(params["c1"]),
                resident(params["w2"]), resident(params["c2"]),
                resident(params["w3"]), resident(params["c3"]),
                resident(params["w4"]), resident(params["b4"]),
            ],
            out_specs=pl.BlockSpec((batch_tile, ncp), lambda i: (i, 0)),
        ),
        compiler_params=pltpu.CompilerParams(
            dimension_semantics=("parallel",)),
    )(xp,
      params["w1"], params["c1"],
      params["w2"], params["c2"],
      params["w3"], params["c3"],
      params["w4"], params["b4"])

    return out[:B, :num_classes]


def init_params(key, input_dim, num_classes, eps=1e-5):
    """Deterministic synthetic parameters matching DenseModel.__init__ shapes.

    BatchNorm1d (eval mode, running stats) is folded into each Linear:
      scale = gamma / sqrt(running_var + eps)
      W_folded = W * scale          (per output column)
      shift    = beta - running_mean * scale + bias * scale
    Weights are stored transposed ([in, out]) as bfloat16 (MXU-native); shifts stay f32.
    Layer-3 width (64) and num_classes are lane-padded to 128 HERE, once, so the per-call
    hot path contains no pad ops. Padded shift lanes are 0 (ReLU keeps them 0) and padded
    w4 rows/cols are 0, so no garbage leaks into the real output lanes.
    """
    dims = [input_dim, 256, 128, 64, num_classes]
    keys = iter(jax.random.split(key, 20))

    def linear(kw, kb, din, dout):
        bound = 1.0 / jnp.sqrt(din)
        w = jax.random.uniform(kw, (din, dout), jnp.float32, -bound, bound)
        b = jax.random.uniform(kb, (dout,), jnp.float32, -bound, bound)
        return w, b

    folded = {}
    for layer in range(1, 4):
        din, dout = dims[layer - 1], dims[layer]
        w, b = linear(next(keys), next(keys), din, dout)
        gamma = 1.0 + 0.1 * jax.random.normal(next(keys), (dout,), jnp.float32)
        beta = 0.1 * jax.random.normal(next(keys), (dout,), jnp.float32)
        r_mean = 0.05 * jax.random.normal(next(keys), (dout,), jnp.float32)
        r_var = jnp.abs(1.0 + 0.1 * jax.random.normal(next(keys), (dout,), jnp.float32))
        scale = gamma / jnp.sqrt(r_var + eps)
        shift = beta - r_mean * scale + b * scale
        folded[f"w{layer}"] = w * scale[None, :]
        folded[f"c{layer}"] = shift[None, :]

    w4, b4 = linear(next(keys), next(keys), dims[3], dims[4])

    # One-time lane padding (out of the per-call path).
    h3 = dims[3]
    h3p = _round_up(max(h3, LANE), LANE)
    ncp = _round_up(max(num_classes, LANE), LANE)

    params = {
        "w1": folded["w1"].astype(jnp.bfloat16),
        "c1": folded["c1"].astype(jnp.float32),
        "w2": folded["w2"].astype(jnp.bfloat16),
        "c2": folded["c2"].astype(jnp.float32),
        "w3": jnp.pad(folded["w3"], ((0, 0), (0, h3p - h3))).astype(jnp.bfloat16),
        "c3": jnp.pad(folded["c3"], ((0, 0), (0, h3p - h3))).astype(jnp.float32),
        "w4": jnp.pad(w4, ((0, h3p - h3), (0, ncp - num_classes))).astype(jnp.bfloat16),
        "b4": jnp.pad(b4[None, :], ((0, 0), (0, ncp - num_classes))).astype(jnp.float32),
    }
    return params


def reference_forward(x, params, num_classes):
    """Pure-JAX reference with identical math (bf16 matmul operands, f32 accumulation)."""
    def layer(h, w, c):
        y = jnp.dot(h.astype(w.dtype), w, preferred_element_type=jnp.float32)
        return jnp.maximum(y + c, 0.0)

    h = layer(x, params["w1"], params["c1"])
    h = layer(h, params["w2"], params["c2"])
    h = layer(h, params["w3"], params["c3"])
    y = (jnp.dot(h.astype(params["w4"].dtype), params["w4"],
                 preferred_element_type=jnp.float32)
         + params["b4"])
    return y[:, :num_classes]


if __name__ == "__main__":
    INPUT_DIM = 32
    NUM_CLASSES = 10
    BATCH = 8

    key = jax.random.PRNGKey(0)
    k_params, k_x = jax.random.split(key)
    params = init_params(k_params, INPUT_DIM, NUM_CLASSES)
    x = jax.random.normal(k_x, (BATCH, INPUT_DIM), jnp.float32)

    out = dense_model_forward(x, params, num_classes=NUM_CLASSES)
    out = jax.block_until_ready(out)

    ref = reference_forward(x, params, NUM_CLASSES)
    assert out.shape == (BATCH, NUM_CLASSES), out.shape
    assert jnp.allclose(out, ref, atol=1e-3, rtol=1e-3)
    # TODO(synk): training-mode Dropout (stochastic masking) and batch-stat BatchNorm are not
    # implemented; this kernel reproduces eval/inference semantics (dropout == identity,
    # BN folded with running stats).
    print("KERNEL_OK")
</pallas_src>

<mosaic_0001>
module attributes {stable_mosaic.version = 11 : i64} {
  func.func @dense_model_kernel(%arg0: i32, %arg1: memref<8x32xbf16, #tpu.memory_space<vmem>>, %arg2: memref<32x256xbf16, #tpu.memory_space<vmem>>, %arg3: memref<1x256xf32, #tpu.memory_space<vmem>>, %arg4: memref<256x128xbf16, #tpu.memory_space<vmem>>, %arg5: memref<1x128xf32, #tpu.memory_space<vmem>>, %arg6: memref<128x128xbf16, #tpu.memory_space<vmem>>, %arg7: memref<1x128xf32, #tpu.memory_space<vmem>>, %arg8: memref<128x128xbf16, #tpu.memory_space<vmem>>, %arg9: memref<1x128xf32, #tpu.memory_space<vmem>>, %arg10: memref<8x128xf32, #tpu.memory_space<vmem>>) attributes {dimension_semantics = [#tpu.dimension_semantics<parallel>], iteration_bounds = array<i64: 1>, scalar_prefetch = 0 : i64, scratch_operands = 0 : i64, tpu.core_type = #tpu.core_type<tc>, window_params = [{transform_indices = @transform_0, window_bounds = array<i64: 8, 32>}, {pipeline_mode = #tpu.pipeline_mode<synchronous>, transform_indices = @transform_1, window_bounds = array<i64: 32, 256>}, {pipeline_mode = #tpu.pipeline_mode<synchronous>, transform_indices = @transform_2, window_bounds = array<i64: 1, 256>}, {pipeline_mode = #tpu.pipeline_mode<synchronous>, transform_indices = @transform_3, window_bounds = array<i64: 256, 128>}, {pipeline_mode = #tpu.pipeline_mode<synchronous>, transform_indices = @transform_4, window_bounds = array<i64: 1, 128>}, {pipeline_mode = #tpu.pipeline_mode<synchronous>, transform_indices = @transform_5, window_bounds = array<i64: 128, 128>}, {pipeline_mode = #tpu.pipeline_mode<synchronous>, transform_indices = @transform_6, window_bounds = array<i64: 1, 128>}, {pipeline_mode = #tpu.pipeline_mode<synchronous>, transform_indices = @transform_7, window_bounds = array<i64: 128, 128>}, {pipeline_mode = #tpu.pipeline_mode<synchronous>, transform_indices = @transform_8, window_bounds = array<i64: 1, 128>}, {transform_indices = @transform_9, window_bounds = array<i64: 8, 128>}]} {
    %c0 = arith.constant 0 : index
    %c0_0 = arith.constant 0 : index
    %0 = vector.load %arg1[%c0, %c0_0] : memref<8x32xbf16, #tpu.memory_space<vmem>>, vector<8x32xbf16>
    %c0_1 = arith.constant 0 : index
    %c0_2 = arith.constant 0 : index
    %1 = vector.load %arg2[%c0_1, %c0_2] : memref<32x256xbf16, #tpu.memory_space<vmem>>, vector<32x256xbf16>
    %cst = arith.constant dense<0.000000e+00> : vector<8x256xf32>
    %2 = tpu.matmul %0, %1, %cst {dimension_numbers = #tpu.dot_dimension_numbers<[1], [0], [0], [1], [0, 0, 1, 1], [], []>} : vector<8x32xbf16>, vector<32x256xbf16>, vector<8x256xf32> -> vector<8x256xf32>
    %c0_3 = arith.constant 0 : index
    %c0_4 = arith.constant 0 : index
    %3 = vector.load %arg3[%c0_3, %c0_4] : memref<1x256xf32, #tpu.memory_space<vmem>>, vector<1x256xf32>
    %4 = vector.broadcast %3 : vector<1x256xf32> to vector<8x256xf32>
    %5 = arith.addf %2, %4 : vector<8x256xf32>
    %cst_5 = arith.constant 0.000000e+00 : f32
    %6 = vector.broadcast %cst_5 : f32 to vector<8x256xf32>
    %7 = arith.maximumf %5, %6 : vector<8x256xf32>
    %8 = arith.truncf %7 : vector<8x256xf32> to vector<8x256xbf16>
    %c0_6 = arith.constant 0 : index
    %c0_7 = arith.constant 0 : index
    %9 = vector.load %arg4[%c0_6, %c0_7] : memref<256x128xbf16, #tpu.memory_space<vmem>>, vector<256x128xbf16>
    %cst_8 = arith.constant dense<0.000000e+00> : vector<8x128xf32>
    %10 = tpu.matmul %8, %9, %cst_8 {dimension_numbers = #tpu.dot_dimension_numbers<[1], [0], [0], [1], [0, 0, 1, 1], [], []>} : vector<8x256xbf16>, vector<256x128xbf16>, vector<8x128xf32> -> vector<8x128xf32>
    %c0_9 = arith.constant 0 : index
    %c0_10 = arith.constant 0 : index
    %11 = vector.load %arg5[%c0_9, %c0_10] : memref<1x128xf32, #tpu.memory_space<vmem>>, vector<1x128xf32>
    %12 = vector.broadcast %11 : vector<1x128xf32> to vector<8x128xf32>
    %13 = arith.addf %10, %12 : vector<8x128xf32>
    %cst_11 = arith.constant 0.000000e+00 : f32
    %14 = vector.broadcast %cst_11 : f32 to vector<8x128xf32>
    %15 = arith.maximumf %13, %14 : vector<8x128xf32>
    %16 = arith.truncf %15 : vector<8x128xf32> to vector<8x128xbf16>
    %c0_12 = arith.constant 0 : index
    %c0_13 = arith.constant 0 : index
    %17 = vector.load %arg6[%c0_12, %c0_13] : memref<128x128xbf16, #tpu.memory_space<vmem>>, vector<128x128xbf16>
    %cst_14 = arith.constant dense<0.000000e+00> : vector<8x128xf32>
    %18 = tpu.matmul %16, %17, %cst_14 {dimension_numbers = #tpu.dot_dimension_numbers<[1], [0], [0], [1], [0, 0, 1, 1], [], []>} : vector<8x128xbf16>, vector<128x128xbf16>, vector<8x128xf32> -> vector<8x128xf32>
    %c0_15 = arith.constant 0 : index
    %c0_16 = arith.constant 0 : index
    %19 = vector.load %arg7[%c0_15, %c0_16] : memref<1x128xf32, #tpu.memory_space<vmem>>, vector<1x128xf32>
    %20 = vector.broadcast %19 : vector<1x128xf32> to vector<8x128xf32>
    %21 = arith.addf %18, %20 : vector<8x128xf32>
    %cst_17 = arith.constant 0.000000e+00 : f32
    %22 = vector.broadcast %cst_17 : f32 to vector<8x128xf32>
    %23 = arith.maximumf %21, %22 : vector<8x128xf32>
    %24 = arith.truncf %23 : vector<8x128xf32> to vector<8x128xbf16>
    %c0_18 = arith.constant 0 : index
    %c0_19 = arith.constant 0 : index
    %25 = vector.load %arg8[%c0_18, %c0_19] : memref<128x128xbf16, #tpu.memory_space<vmem>>, vector<128x128xbf16>
    %cst_20 = arith.constant dense<0.000000e+00> : vector<8x128xf32>
    %26 = tpu.matmul %24, %25, %cst_20 {dimension_numbers = #tpu.dot_dimension_numbers<[1], [0], [0], [1], [0, 0, 1, 1], [], []>} : vector<8x128xbf16>, vector<128x128xbf16>, vector<8x128xf32> -> vector<8x128xf32>
    %c0_21 = arith.constant 0 : index
    %c0_22 = arith.constant 0 : index
    %27 = vector.load %arg9[%c0_21, %c0_22] : memref<1x128xf32, #tpu.memory_space<vmem>>, vector<1x128xf32>
    %28 = vector.broadcast %27 : vector<1x128xf32> to vector<8x128xf32>
    %29 = arith.addf %26, %28 : vector<8x128xf32>
    %c0_23 = arith.constant 0 : index
    %c0_24 = arith.constant 0 : index
    %30 = vector.load %arg10[%c0_23, %c0_24] : memref<8x128xf32, #tpu.memory_space<vmem>>, vector<8x128xf32>
    tpu.vector_store %arg10[%c0_23, %c0_24], %29 {strides = array<i32>} : memref<8x128xf32, #tpu.memory_space<vmem>>, vector<8x128xf32>,
    return
  }
  func.func @transform_0(%arg0: i32) -> (i32, i32) {
    %c0_i32 = arith.constant 0 : i32
    %c0_i32_0 = arith.constant 0 : i32
    return %arg0, %c0_i32 : i32, i32
  }
  func.func @transform_1(%arg0: i32) -> (i32, i32) {
    %c0_i32 = arith.constant 0 : i32
    %c0_i32_0 = arith.constant 0 : i32
    %c0_i32_1 = arith.constant 0 : i32
    return %c0_i32, %c0_i32_0 : i32, i32
  }
  func.func @transform_2(%arg0: i32) -> (i32, i32) {
    %c0_i32 = arith.constant 0 : i32
    %c0_i32_0 = arith.constant 0 : i32
    %c0_i32_1 = arith.constant 0 : i32
    return %c0_i32, %c0_i32_0 : i32, i32
  }
  func.func @transform_3(%arg0: i32) -> (i32, i32) {
    %c0_i32 = arith.constant 0 : i32
    %c0_i32_0 = arith.constant 0 : i32
    %c0_i32_1 = arith.constant 0 : i32
    return %c0_i32, %c0_i32_0 : i32, i32
  }
  func.func @transform_4(%arg0: i32) -> (i32, i32) {
    %c0_i32 = arith.constant 0 : i32
    %c0_i32_0 = arith.constant 0 : i32
    %c0_i32_1 = arith.constant 0 : i32
    return %c0_i32, %c0_i32_0 : i32, i32
  }
  func.func @transform_5(%arg0: i32) -> (i32, i32) {
    %c0_i32 = arith.constant 0 : i32
    %c0_i32_0 = arith.constant 0 : i32
    %c0_i32_1 = arith.constant 0 : i32
    return %c0_i32, %c0_i32_0 : i32, i32
  }
  func.func @transform_6(%arg0: i32) -> (i32, i32) {
    %c0_i32 = arith.constant 0 : i32
    %c0_i32_0 = arith.constant 0 : i32
    %c0_i32_1 = arith.constant 0 : i32
    return %c0_i32, %c0_i32_0 : i32, i32
  }
  func.func @transform_7(%arg0: i32) -> (i32, i32) {
    %c0_i32 = arith.constant 0 : i32
    %c0_i32_0 = arith.constant 0 : i32
    %c0_i32_1 = arith.constant 0 : i32
    return %c0_i32, %c0_i32_0 : i32, i32
  }
  func.func @transform_8(%arg0: i32) -> (i32, i32) {
    %c0_i32 = arith.constant 0 : i32
    %c0_i32_0 = arith.constant 0 : i32
    %c0_i32_1 = arith.constant 0 : i32
    return %c0_i32, %c0_i32_0 : i32, i32
  }
  func.func @transform_9(%arg0: i32) -> (i32, i32) {
    %c0_i32 = arith.constant 0 : i32
    %c0_i32_0 = arith.constant 0 : i32
    return %arg0, %c0_i32 : i32, i32
  }
}

</mosaic_0001>

<llo_original>
// kernel: dense_model_forward.1
$region0: #{dense_model_forward.1}
  #allocation0 [shape = 'u32[]', space=smem, size = 0x4, offset = 0x4, fixed_abs, tag = 'smem constant byte address 0x4 - core index']
  #allocation1 [shape = 'u32[72,128]{1,0:T(1,128)}', space=vmem, size = 0x9000, scoped, tag = 'internal scratch']
  %s0 = inlined_call_operand.vmem [shape: bf16[8,32], index: 0, kind: input, shape index: {}]
  %s1 = inlined_call_operand.hbm [shape: bf16[32,256], index: 1, kind: input, shape index: {}]
  %s2 = inlined_call_operand.vmem [shape: f32[1,256], index: 2, kind: input, shape index: {}]
  %s3 = inlined_call_operand.hbm [shape: bf16[256,128], index: 3, kind: input, shape index: {}]
  %s4 = inlined_call_operand.vmem [shape: f32[1,128], index: 4, kind: input, shape index: {}]
  %s5 = inlined_call_operand.hbm [shape: bf16[128,128], index: 5, kind: input, shape index: {}]
  %s6 = inlined_call_operand.vmem [shape: f32[1,128], index: 6, kind: input, shape index: {}]
  %s7 = inlined_call_operand.hbm [shape: bf16[128,128], index: 7, kind: input, shape index: {}]
  %s8 = inlined_call_operand.vmem [shape: f32[1,128], index: 8, kind: input, shape index: {}]
  %s9 = inlined_call_operand.hbm [shape: f32[8,128], index: 9, kind: output, shape index: {}]
  %s10 = sld [smem:[#allocation0]]
  $region62: #{dense_model_forward.1} parent=0
    _
  %s12 = ssub.s32 1, %s10
  %s13 = scalar_select 0, %s12, %s10
  $region1: #{dense_model_forward.1} parent=0
    #allocation2 [shape = 'u8[16384]{0}', space=vmem, size = 0x4000, scoped, tag = 'input window, operand 1, single buffered']
    #allocation3 [shape = 's32[1]{0}', space=sflag, size = 0x4, scoped, tag = 'scoped memory for dense_model_forward.1']
    #allocation4 [shape = 's32[1]{0}', space=sflag, size = 0x4, scoped, tag = 'scoped memory for dense_model_forward.1']
    #allocation5 [shape = 'u8[65536]{0}', space=vmem, size = 0x10000, scoped, tag = 'input window, operand 3, single buffered']
    #allocation6 [shape = 's32[1]{0}', space=sflag, size = 0x4, scoped, tag = 'scoped memory for dense_model_forward.1']
    #allocation7 [shape = 'u8[32768]{0}', space=vmem, size = 0x8000, scoped, tag = 'input window, operand 5, single buffered']
    #allocation8 [shape = 'u8[32768]{0}', space=vmem, size = 0x8000, scoped, tag = 'input window, operand 7, single buffered']
    #allocation9 [shape = 's32[1]{0}', space=sflag, size = 0x4, scoped, tag = 'scoped memory for dense_model_forward.1']
    #allocation10 [shape = 'u8[4096]{0}', space=vmem, size = 0x1000, scoped, tag = 'output window, operand 0, single buffered']
    %14 = vsyncpa [#allocation3], 0
    %15 = vsyncpa [#allocation6], 0
    %16 = vsyncpa [#allocation9], 0
    %17 = vsyncpa [#allocation4], 0
    // Predicated region
    $region2: #{dense_model_forward.1} parent=1 // pred_check
      _
    $region3: #{dense_model_forward.1} parent=1 // pred_check_branch
      %19 = sbr.rel (0) target = $region5
    $region4: #{dense_model_forward.1} parent=1 // pred_region
      _
    $region5: #{dense_model_forward.1} parent=1 // pred_fallthru
      _
    // Predicated region
    $region6: #{dense_model_forward.1} parent=1 // pred_check
      _
    $region7: #{dense_model_forward.1} parent=1 // pred_check_branch
      %21 = sbr.rel (0) target = $region9
    $region8: #{dense_model_forward.1} parent=1 // pred_region
      %23 = vsyncadd [#allocation3], 0
      %s24 = sshll.u32 %s1, 4
      %s25 = int_to_ptr.hbm [resolvable:$true] %s24
      %s26 = sshll.u32 [#allocation2], 4
      %s27 = int_to_ptr.vmem [resolvable:$true] %s26
      %32 = dma.hbm_to_vmem [thread:$0]  %s25, 512, %s27, [#allocation3], 128, 128, 8
    $region9: #{dense_model_forward.1} parent=1 // pred_fallthru
      _
    // Predicated region
    $region10: #{dense_model_forward.1} parent=1 // pred_check
      _
    $region11: #{dense_model_forward.1} parent=1 // pred_check_branch
      %34 = sbr.rel (0) target = $region13
    $region12: #{dense_model_forward.1} parent=1 // pred_region
      _
    $region13: #{dense_model_forward.1} parent=1 // pred_fallthru
      _
    // Predicated region
    $region14: #{dense_model_forward.1} parent=1 // pred_check
      _
    $region15: #{dense_model_forward.1} parent=1 // pred_check_branch
      %36 = sbr.rel (0) target = $region17
    $region16: #{dense_model_forward.1} parent=1 // pred_region
      %38 = vsyncadd [#allocation6], 0
      %s39 = sshll.u32 %s3, 4
      %s40 = int_to_ptr.hbm [resolvable:$true] %s39
      %s41 = sshll.u32 [#allocation5], 4
      %s42 = int_to_ptr.vmem [resolvable:$true] %s41
      %47 = dma.hbm_to_vmem [thread:$0]  %s40, 2048, %s42, [#allocation6], 64, 64, 4
    $region17: #{dense_model_forward.1} parent=1 // pred_fallthru
      _
    // Predicated region
    $region18: #{dense_model_forward.1} parent=1 // pred_check
      _
    $region19: #{dense_model_forward.1} parent=1 // pred_check_branch
      %49 = sbr.rel (0) target = $region21
    $region20: #{dense_model_forward.1} parent=1 // pred_region
      _
    $region21: #{dense_model_forward.1} parent=1 // pred_fallthru
      _
    // Predicated region
    $region22: #{dense_model_forward.1} parent=1 // pred_check
      _
    $region23: #{dense_model_forward.1} parent=1 // pred_check_branch
      %51 = sbr.rel (0) target = $region25
    $region24: #{dense_model_forward.1} parent=1 // pred_region
      %53 = vsyncadd [#allocation6], 0
      %s54 = sshll.u32 %s5, 4
      %s55 = int_to_ptr.hbm [resolvable:$true] %s54
      %s56 = sshll.u32 [#allocation7], 4
      %s57 = int_to_ptr.vmem [resolvable:$true] %s56
      %62 = dma.hbm_to_vmem [thread:$0]  %s55, 1024, %s57, [#allocation6], 64, 64, 4
    $region25: #{dense_model_forward.1} parent=1 // pred_fallthru
      _
    // Predicated region
    $region26: #{dense_model_forward.1} parent=1 // pred_check
      _
    $region27: #{dense_model_forward.1} parent=1 // pred_check_branch
      %64 = sbr.rel (0) target = $region29
    $region28: #{dense_model_forward.1} parent=1 // pred_region
      _
    $region29: #{dense_model_forward.1} parent=1 // pred_fallthru
      _
    // Predicated region
    $region30: #{dense_model_forward.1} parent=1 // pred_check
      _
    $region31: #{dense_model_forward.1} parent=1 // pred_check_branch
      %66 = sbr.rel (0) target = $region33
    $region32: #{dense_model_forward.1} parent=1 // pred_region
      %68 = vsyncadd [#allocation9], 0
      %s69 = sshll.u32 %s7, 4
      %s70 = int_to_ptr.hbm [resolvable:$true] %s69
      %s71 = sshll.u32 [#allocation8], 4
      %s72 = int_to_ptr.vmem [resolvable:$true] %s71
      %77 = dma.hbm_to_vmem [thread:$0]  %s70, 1024, %s72, [#allocation9], 64, 64, 4
    $region33: #{dense_model_forward.1} parent=1 // pred_fallthru
      _
    // Predicated region
    $region34: #{dense_model_forward.1} parent=1 // pred_check
      _
    $region35: #{dense_model_forward.1} parent=1 // pred_check_branch
      %79 = sbr.rel (0) target = $region37
    $region36: #{dense_model_forward.1} parent=1 // pred_region
      _
    $region37: #{dense_model_forward.1} parent=1 // pred_fallthru
      _
    // Predicated region
    $region38: #{dense_model_forward.1} parent=1 // pred_check
      _
    $region39: #{dense_model_forward.1} parent=1 // pred_check_branch
      %81 = sbr.rel (0) target = $region41
    $region40: #{dense_model_forward.1} parent=1 // pred_region
      %83 = dma.done [#allocation3], 512
    $region41: #{dense_model_forward.1} parent=1 // pred_fallthru
      _
    // Predicated region
    $region42: #{dense_model_forward.1} parent=1 // pred_check
      _
    $region43: #{dense_model_forward.1} parent=1 // pred_check_branch
      %85 = sbr.rel (0) target = $region45
    $region44: #{dense_model_forward.1} parent=1 // pred_region
      %87 = dma.done [#allocation6], 2048
    $region45: #{dense_model_forward.1} parent=1 // pred_fallthru
      _
    // Predicated region
    $region46: #{dense_model_forward.1} parent=1 // pred_check
      _
    $region47: #{dense_model_forward.1} parent=1 // pred_check_branch
      %89 = sbr.rel (0) target = $region49
    $region48: #{dense_model_forward.1} parent=1 // pred_region
      %91 = dma.done [#allocation6], 1024
    $region49: #{dense_model_forward.1} parent=1 // pred_fallthru
      _
    // Predicated region
    $region50: #{dense_model_forward.1} parent=1 // pred_check
      _
    $region51: #{dense_model_forward.1} parent=1 // pred_check_branch
      %93 = sbr.rel (0) target = $region53
    $region52: #{dense_model_forward.1} parent=1 // pred_region
      %95 = dma.done [#allocation9], 1024
    $region53: #{dense_model_forward.1} parent=1 // pred_fallthru
      _
    %v97 = vld [vmem:[%s0] sm:$0xf]
    %v98 = vld [vmem:[#allocation2] sm:$0xff]
    %v99 = vld [vmem:[#allocation2 + $0x8] sm:$0xff]
    %v100 = vld [vmem:[#allocation2 + $0x10] sm:$0xff]
    %v101 = vld [vmem:[#allocation2 + $0x18] sm:$0xff]
    %v102 = vld [vmem:[%s2] sm:$0x3]
    %v104 = vperm.slane %v102, 0
    %v105 = vperm.slane %v102, 1
    %v112 = vunpack.c.l.b16 %v98
    %v113 = vunpack.c.h.b16 %v98
    %v114 = vunpack.c.l.b16 %v99
    %v115 = vunpack.c.h.b16 %v99
    %v116 = vunpack.c.l.b16 %v100
    %v117 = vunpack.c.h.b16 %v100
    %v118 = vunpack.c.l.b16 %v101
    %v119 = vunpack.c.h.b16 %v101
    %v120 = vpack.c.b16 %v114, %v112
    %v121 = vpack.c.b16 %v115, %v113
    %v122 = vpack.c.b16 %v118, %v116
    %v123 = vpack.c.b16 %v119, %v117
    %vm128 = vcmask 261120
    %v130 = vsel %vm128, %v97, 0
    %132 = vmatpush.bf16.msra.mxu0 0
    %133 = vmatpush.bf16.msra.mxu0 0
    %134 = vmatpush.bf16.msra.mxu0 0
    %135 = vmatpush.bf16.msra.mxu0 0
    %136 = vmatpush.bf16.msra.mxu0 0
    %137 = vmatpush.bf16.msra.mxu0 0
    %138 = vmatpush.bf16.msra.mxu0 %v122
    %139 = vmatpush.bf16.msra.mxu0 %v120
    %140 = vmatmul.bf16.gmra.mxu0 %v130
    %v141 = vpop.f32.mrf.mxu0
    %v142 = vadd.f32 %v104, %v141
    %v143 = vpop.f32.mrf.mxu0
    %144 = vdwg.mxu0
    %145 = vmatpush.bf16.msra.mxu0 0
    %146 = vmatpush.bf16.msra.mxu0 0
    %147 = vmatpush.bf16.msra.mxu0 0
    %148 = vmatpush.bf16.msra.mxu0 0
    %149 = vmatpush.bf16.msra.mxu0 0
    %150 = vmatpush.bf16.msra.mxu0 0
    %151 = vmatpush.bf16.msra.mxu0 %v123
    %152 = vmatpush.bf16.msra.mxu0 %v121
    %153 = vmatmul.bf16.gmra.mxu0 %v130
    %v154 = vpop.f32.mrf.mxu0
    %v155 = vadd.f32 %v105, %v154
    %v156 = vpop.f32.mrf.mxu0
    %157 = vdwg.mxu0
    %v158 = vmax.f32 %v142, 0.0
    %v159 = vmax.f32 %v155, 0.0
    %v160 = vpack.c.bf16 %v158, %v158
    %v161 = vpack.c.bf16 %v159, %v159
    %v162 = vld [vmem:[#allocation5] sm:$0xf]
    %v163 = vld [vmem:[#allocation5 + $0x4] sm:$0xf]
    %v164 = vld [vmem:[#allocation5 + $0x8] sm:$0xf]
    %v165 = vld [vmem:[#allocation5 + $0xc] sm:$0xf]
    %v166 = vld [vmem:[#allocation5 + $0x10] sm:$0xf]
    %v167 = vld [vmem:[#allocation5 + $0x14] sm:$0xf]
    %v168 = vld [vmem:[#allocation5 + $0x18] sm:$0xf]
    %v169 = vld [vmem:[#allocation5 + $0x1c] sm:$0xf]
    %v170 = vld [vmem:[#allocation5 + $0x20] sm:$0xf]
    %v171 = vld [vmem:[#allocation5 + $0x24] sm:$0xf]
    %v172 = vld [vmem:[#allocation5 + $0x28] sm:$0xf]
    %v173 = vld [vmem:[#allocation5 + $0x2c] sm:$0xf]
    %v174 = vld [vmem:[#allocation5 + $0x30] sm:$0xf]
    %v175 = vld [vmem:[#allocation5 + $0x34] sm:$0xf]
    %v176 = vld [vmem:[#allocation5 + $0x38] sm:$0xf]
    %v177 = vld [vmem:[#allocation5 + $0x3c] sm:$0xf]
    %v178 = vld [vmem:[#allocation5 + $0x40] sm:$0xf]
    %v179 = vld [vmem:[#allocation5 + $0x44] sm:$0xf]
    %v180 = vld [vmem:[#allocation5 + $0x48] sm:$0xf]
    %v181 = vld [vmem:[#allocation5 + $0x4c] sm:$0xf]
    %v182 = vld [vmem:[#allocation5 + $0x50] sm:$0xf]
    %v183 = vld [vmem:[#allocation5 + $0x54] sm:$0xf]
    %v184 = vld [vmem:[#allocation5 + $0x58] sm:$0xf]
    %v185 = vld [vmem:[#allocation5 + $0x5c] sm:$0xf]
    %v186 = vld [vmem:[#allocation5 + $0x60] sm:$0xf]
    %v187 = vld [vmem:[#allocation5 + $0x64] sm:$0xf]
    %v188 = vld [vmem:[#allocation5 + $0x68] sm:$0xf]
    %v189 = vld [vmem:[#allocation5 + $0x6c] sm:$0xf]
    %v190 = vld [vmem:[#allocation5 + $0x70] sm:$0xf]
    %v191 = vld [vmem:[#allocation5 + $0x74] sm:$0xf]
    %v192 = vld [vmem:[#allocation5 + $0x78] sm:$0xf]
    %v193 = vld [vmem:[#allocation5 + $0x7c] sm:$0xf]
    %v194 = vld [vmem:[%s4] sm:$0x1]
    %v196 = vperm.slane %v194, 0
    %v230 = vunpack.c.l.b16 %v162
    %v231 = vunpack.c.l.b16 %v163
    %v232 = vunpack.c.l.b16 %v164
    %v233 = vunpack.c.l.b16 %v165
    %v234 = vunpack.c.l.b16 %v166
    %v235 = vunpack.c.l.b16 %v167
    %v236 = vunpack.c.l.b16 %v168
    %v237 = vunpack.c.l.b16 %v169
    %v238 = vunpack.c.l.b16 %v170
    %v239 = vunpack.c.l.b16 %v171
    %v240 = vunpack.c.l.b16 %v172
    %v241 = vunpack.c.l.b16 %v173
    %v242 = vunpack.c.l.b16 %v174
    %v243 = vunpack.c.l.b16 %v175
    %v244 = vunpack.c.l.b16 %v176
    %v245 = vunpack.c.l.b16 %v177
    %v246 = vunpack.c.l.b16 %v178
    %v247 = vunpack.c.l.b16 %v179
    %v248 = vunpack.c.l.b16 %v180
    %v249 = vunpack.c.l.b16 %v181
    %v250 = vunpack.c.l.b16 %v182
    %v251 = vunpack.c.l.b16 %v183
    %v252 = vunpack.c.l.b16 %v184
    %v253 = vunpack.c.l.b16 %v185
    %v254 = vunpack.c.l.b16 %v186
    %v255 = vunpack.c.l.b16 %v187
    %v256 = vunpack.c.l.b16 %v188
    %v257 = vunpack.c.l.b16 %v189
    %v258 = vunpack.c.l.b16 %v190
    %v259 = vunpack.c.l.b16 %v191
    %v260 = vunpack.c.l.b16 %v192
    %v261 = vunpack.c.l.b16 %v193
    %v262 = vpack.c.b16 %v231, %v230
    %v263 = vpack.c.b16 %v233, %v232
    %v264 = vpack.c.b16 %v235, %v234
    %v265 = vpack.c.b16 %v237, %v236
    %v266 = vpack.c.b16 %v239, %v238
    %v267 = vpack.c.b16 %v241, %v240
    %v268 = vpack.c.b16 %v243, %v242
    %v269 = vpack.c.b16 %v245, %v244
    %v270 = vpack.c.b16 %v247, %v246
    %v271 = vpack.c.b16 %v249, %v248
    %v272 = vpack.c.b16 %v251, %v250
    %v273 = vpack.c.b16 %v253, %v252
    %v274 = vpack.c.b16 %v255, %v254
    %v275 = vpack.c.b16 %v257, %v256
    %v276 = vpack.c.b16 %v259, %v258
    %v277 = vpack.c.b16 %v261, %v260
    %294 = vmatpush.bf16.msra.mxu0 %v269
    %295 = vmatpush.bf16.msra.mxu0 %v268
    %296 = vmatpush.bf16.msra.mxu0 %v267
    %297 = vmatpush.bf16.msra.mxu0 %v266
    %298 = vmatpush.bf16.msra.mxu0 %v265
    %299 = vmatpush.bf16.msra.mxu0 %v264
    %300 = vmatpush.bf16.msra.mxu0 %v263
    %301 = vmatpush.bf16.msra.mxu0 %v262
    %302 = vmatmul.bf16.gmra.mxu0 %v160
    %v303 = vpop.f32.mrf.mxu0
    %v304 = vadd.f32 %v196, %v303
    %v305 = vpop.f32.mrf.mxu0
    %306 = vdwg.mxu0
    %307 = vmatpush.bf16.msra.mxu0 %v277
    %308 = vmatpush.bf16.msra.mxu0 %v276
    %309 = vmatpush.bf16.msra.mxu0 %v275
    %310 = vmatpush.bf16.msra.mxu0 %v274
    %311 = vmatpush.bf16.msra.mxu0 %v273
    %312 = vmatpush.bf16.msra.mxu0 %v272
    %313 = vmatpush.bf16.msra.mxu0 %v271
    %314 = vmatpush.bf16.msra.mxu0 %v270
    %315 = vmatmul.bf16.gmra.mxu0 %v161
    %v316 = vpop.f32.mrf.mxu0
    %v317 = vadd.f32 %v304, %v316
    %v318 = vpop.f32.mrf.mxu0
    %319 = vdwg.mxu0
    %v320 = vmax.f32 %v317, 0.0
    %v321 = vpack.c.bf16 %v320, %v320
    %v322 = vld [vmem:[#allocation7] sm:$0xf]
    %v323 = vld [vmem:[#allocation7 + $0x4] sm:$0xf]
    %v324 = vld [vmem:[#allocation7 + $0x8] sm:$0xf]
    %v325 = vld [vmem:[#allocation7 + $0xc] sm:$0xf]
    %v326 = vld [vmem:[#allocation7 + $0x10] sm:$0xf]
    %v327 = vld [vmem:[#allocation7 + $0x14] sm:$0xf]
    %v328 = vld [vmem:[#allocation7 + $0x18] sm:$0xf]
    %v329 = vld [vmem:[#allocation7 + $0x1c] sm:$0xf]
    %v330 = vld [vmem:[#allocation7 + $0x20] sm:$0xf]
    %v331 = vld [vmem:[#allocation7 + $0x24] sm:$0xf]
    %v332 = vld [vmem:[#allocation7 + $0x28] sm:$0xf]
    %v333 = vld [vmem:[#allocation7 + $0x2c] sm:$0xf]
    %v334 = vld [vmem:[#allocation7 + $0x30] sm:$0xf]
    %v335 = vld [vmem:[#allocation7 + $0x34] sm:$0xf]
    %v336 = vld [vmem:[#allocation7 + $0x38] sm:$0xf]
    %v337 = vld [vmem:[#allocation7 + $0x3c] sm:$0xf]
    %v338 = vld [vmem:[%s6] sm:$0x1]
    %v340 = vperm.slane %v338, 0
    %v358 = vunpack.c.l.b16 %v322
    %v359 = vunpack.c.l.b16 %v323
    %v360 = vunpack.c.l.b16 %v324
    %v361 = vunpack.c.l.b16 %v325
    %v362 = vunpack.c.l.b16 %v326
    %v363 = vunpack.c.l.b16 %v327
    %v364 = vunpack.c.l.b16 %v328
    %v365 = vunpack.c.l.b16 %v329
    %v366 = vunpack.c.l.b16 %v330
    %v367 = vunpack.c.l.b16 %v331
    %v368 = vunpack.c.l.b16 %v332
    %v369 = vunpack.c.l.b16 %v333
    %v370 = vunpack.c.l.b16 %v334
    %v371 = vunpack.c.l.b16 %v335
    %v372 = vunpack.c.l.b16 %v336
    %v373 = vunpack.c.l.b16 %v337
    %v374 = vpack.c.b16 %v359, %v358
    %v375 = vpack.c.b16 %v361, %v360
    %v376 = vpack.c.b16 %v363, %v362
    %v377 = vpack.c.b16 %v365, %v364
    %v378 = vpack.c.b16 %v367, %v366
    %v379 = vpack.c.b16 %v369, %v368
    %v380 = vpack.c.b16 %v371, %v370
    %v381 = vpack.c.b16 %v373, %v372
    %390 = vmatpush.bf16.msra.mxu0 %v381
    %391 = vmatpush.bf16.msra.mxu0 %v380
    %392 = vmatpush.bf16.msra.mxu0 %v379
    %393 = vmatpush.bf16.msra.mxu0 %v378
    %394 = vmatpush.bf16.msra.mxu0 %v377
    %395 = vmatpush.bf16.msra.mxu0 %v376
    %396 = vmatpush.bf16.msra.mxu0 %v375
    %397 = vmatpush.bf16.msra.mxu0 %v374
    %398 = vmatmul.bf16.gmra.mxu0 %v321
    %v399 = vpop.f32.mrf.mxu0
    %v400 = vadd.f32 %v340, %v399
    %v401 = vpop.f32.mrf.mxu0
    %402 = vdwg.mxu0
    %v403 = vmax.f32 %v400, 0.0
    %v404 = vpack.c.bf16 %v403, %v403
    %v405 = vld [vmem:[#allocation8] sm:$0xf]
    %v406 = vld [vmem:[#allocation8 + $0x4] sm:$0xf]
    %v407 = vld [vmem:[#allocation8 + $0x8] sm:$0xf]
    %v408 = vld [vmem:[#allocation8 + $0xc] sm:$0xf]
    %v409 = vld [vmem:[#allocation8 + $0x10] sm:$0xf]
    %v410 = vld [vmem:[#allocation8 + $0x14] sm:$0xf]
    %v411 = vld [vmem:[#allocation8 + $0x18] sm:$0xf]
    %v412 = vld [vmem:[#allocation8 + $0x1c] sm:$0xf]
    %v413 = vld [vmem:[#allocation8 + $0x20] sm:$0xf]
    %v414 = vld [vmem:[#allocation8 + $0x24] sm:$0xf]
    %v415 = vld [vmem:[#allocation8 + $0x28] sm:$0xf]
    %v416 = vld [vmem:[#allocation8 + $0x2c] sm:$0xf]
    %v417 = vld [vmem:[#allocation8 + $0x30] sm:$0xf]
    %v418 = vld [vmem:[#allocation8 + $0x34] sm:$0xf]
    %v419 = vld [vmem:[#allocation8 + $0x38] sm:$0xf]
    %v420 = vld [vmem:[#allocation8 + $0x3c] sm:$0xf]
    %v421 = vld [vmem:[%s8] sm:$0x1]
    %v423 = vperm.slane %v421, 0
    %v441 = vunpack.c.l.b16 %v405
    %v442 = vunpack.c.l.b16 %v406
    %v443 = vunpack.c.l.b16 %v407
    %v444 = vunpack.c.l.b16 %v408
    %v445 = vunpack.c.l.b16 %v409
    %v446 = vunpack.c.l.b16 %v410
    %v447 = vunpack.c.l.b16 %v411
    %v448 = vunpack.c.l.b16 %v412
    %v449 = vunpack.c.l.b16 %v413
    %v450 = vunpack.c.l.b16 %v414
    %v451 = vunpack.c.l.b16 %v415
    %v452 = vunpack.c.l.b16 %v416
    %v453 = vunpack.c.l.b16 %v417
    %v454 = vunpack.c.l.b16 %v418
    %v455 = vunpack.c.l.b16 %v419
    %v456 = vunpack.c.l.b16 %v420
    %v457 = vpack.c.b16 %v442, %v441
    %v458 = vpack.c.b16 %v444, %v443
    %v459 = vpack.c.b16 %v446, %v445
    %v460 = vpack.c.b16 %v448, %v447
    %v461 = vpack.c.b16 %v450, %v449
    %v462 = vpack.c.b16 %v452, %v451
    %v463 = vpack.c.b16 %v454, %v453
    %v464 = vpack.c.b16 %v456, %v455
    %473 = vmatpush.bf16.msra.mxu0 %v464
    %474 = vmatpush.bf16.msra.mxu0 %v463
    %475 = vmatpush.bf16.msra.mxu0 %v462
    %476 = vmatpush.bf16.msra.mxu0 %v461
    %477 = vmatpush.bf16.msra.mxu0 %v460
    %478 = vmatpush.bf16.msra.mxu0 %v459
    %479 = vmatpush.bf16.msra.mxu0 %v458
    %480 = vmatpush.bf16.msra.mxu0 %v457
    %481 = vmatmul.bf16.gmra.mxu0 %v404
    %v482 = vpop.f32.mrf.mxu0
    %v483 = vadd.f32 %v423, %v482
    %v484 = vpop.f32.mrf.mxu0
    %485 = vdwg.mxu0
    %486 = vst [vmem:[#allocation10] sm:$0xff] %v483
    // Predicated region
    $region54: #{dense_model_forward.1} parent=1 // pred_check
      _
    $region55: #{dense_model_forward.1} parent=1 // pred_check_branch
      %488 = sbr.rel (0) target = $region57
    $region56: #{dense_model_forward.1} parent=1 // pred_region
      %490 = vsyncadd [#allocation4], 0
      %s492 = sshll.u32 [#allocation10], 4
      %s493 = int_to_ptr.vmem [resolvable:$true] %s492
      %s494 = sshll.u32 %s9, 4
      %s495 = int_to_ptr.hbm [resolvable:$true] %s494
      %497 = dma.vmem_to_hbm [thread:$0]  %s493, 128, %s495, [#allocation4]
    $region57: #{dense_model_forward.1} parent=1 // pred_fallthru
      _
    // Predicated region
    $region58: #{dense_model_forward.1} parent=1 // pred_check
      _
    $region59: #{dense_model_forward.1} parent=1 // pred_check_branch
      %499 = sbr.rel (0) target = $region61
    $region60: #{dense_model_forward.1} parent=1 // pred_region
      %501 = dma.done [#allocation4], 128
    $region61: #{dense_model_forward.1} parent=1 // pred_fallthru
      _
    %502 = vsyncpa [#allocation3], 1
    %503 = vsyncpa [#allocation6], 1
    %504 = vsyncpa [#allocation9], 1
    %505 = vsyncpa [#allocation4], 1

</llo_original>
